<compile_context>
chip_gen: v6e
topology: v6e:2x2x1
jax: 0.10.0
libtpu: 0.0.40
codegen_flags: <defaults>
</compile_context>

<pallas_src>
import jax
import jax.numpy as jnp
from jax import lax
from jax.experimental import pallas as pl
from jax.experimental.pallas import tpu as pltpu

HIDDEN = 32


def _round_up(n, m):
    return ((n + m - 1) // m) * m


def vnet_kernel(x_ref,
                w1t_ref, b1_ref,
                w2t_ref, b2_ref,
                w3t_ref, b3_ref,
                w4_ref, b4_ref,
                o_ref):
    # x block: (tile_b, input_dim) f32 -> bf16 in-kernel (no wrapper HBM pass).
    x = x_ref[...].astype(jnp.bfloat16)

    # fc1 + tanh, batch-on-lanes: h^T = w1^T @ x^T -> (32, tile_b).
    # w1t is (32, in); contract its dim 1 with x's dim 1 (q @ k^T form).
    h = lax.dot_general(w1t_ref[...], x,
                        dimension_numbers=(((1,), (1,)), ((), ())),
                        preferred_element_type=jnp.float32)
    h = jnp.tanh(h + b1_ref[...])                      # (32,1) bias broadcasts over lanes

    # fc2 + relu: standard (32,32) @ (32, tile_b) matmul, f32 accumulation.
    h = jnp.dot(w2t_ref[...], h.astype(jnp.bfloat16),
                preferred_element_type=jnp.float32)
    h = jnp.maximum(h + b2_ref[...], 0.0)

    # fc3 + relu
    h = jnp.dot(w3t_ref[...], h.astype(jnp.bfloat16),
                preferred_element_type=jnp.float32)
    h = jnp.maximum(h + b3_ref[...], 0.0)

    # fc4 (32 -> 1): off the MXU — VPU multiply + sublane (XLU) reduction.
    out = jnp.sum(h * w4_ref[...], axis=0, keepdims=True) + b4_ref[...]   # (1, tile_b)
    o_ref[...] = out.astype(o_ref.dtype)


def vnetwork_forward(x, params, *, tile_b=4096):
    """x: (B, input_dim) float32; params: dict of (in,out) weights and (1,out) biases.

    Returns (B, 1) float32.
    """
    B, input_dim = x.shape

    # Lane-aligned batch tile, clamped to the batch size.
    tile_b = max(128, min(int(tile_b), _round_up(B, 128)))
    tile_b = _round_up(tile_b, 128)
    # Ensure >=2 grid steps when the batch permits so v7x's second TensorCore
    # gets work ("parallel" grid axis); no-op on single-TC v5e/v6e.
    if B > 128 and pl.cdiv(B, tile_b) < 2:
        tile_b = max(128, _round_up(pl.cdiv(B, 2), 128))
    grid = (pl.cdiv(B, tile_b),)

    # Tiny one-time weight preps: pre-transposed bf16 matmul operands and
    # column-vector biases for the transposed (batch-on-lanes) layout.
    bf = jnp.bfloat16
    w1t = params["w1"].T.astype(bf)                      # (32, input_dim)
    w2t = params["w2"].T.astype(bf)                      # (32, 32)
    w3t = params["w3"].T.astype(bf)                      # (32, 32)
    w4c = params["w4"].reshape(HIDDEN, 1).astype(jnp.float32)
    b1c = params["b1"].reshape(HIDDEN, 1)
    b2c = params["b2"].reshape(HIDDEN, 1)
    b3c = params["b3"].reshape(HIDDEN, 1)
    b4c = params["b4"].reshape(1, 1)

    batch_in_map = lambda i: (i, 0)      # x tiled over batch rows
    batch_out_map = lambda i: (0, i)     # out tiled over batch lanes (lane-dense)
    const_map = lambda i: (0, 0)         # weights/biases stay VMEM-resident

    out_t = pl.pallas_call(
        vnet_kernel,
        out_shape=jax.ShapeDtypeStruct((1, B), jnp.float32),
        grid_spec=pltpu.PrefetchScalarGridSpec(
            num_scalar_prefetch=0,
            grid=grid,
            in_specs=[
                pl.BlockSpec((tile_b, input_dim), batch_in_map),    # x
                pl.BlockSpec((HIDDEN, input_dim), const_map),       # w1^T
                pl.BlockSpec((HIDDEN, 1), const_map),               # b1 (column)
                pl.BlockSpec((HIDDEN, HIDDEN), const_map),          # w2^T
                pl.BlockSpec((HIDDEN, 1), const_map),               # b2
                pl.BlockSpec((HIDDEN, HIDDEN), const_map),          # w3^T
                pl.BlockSpec((HIDDEN, 1), const_map),               # b3
                pl.BlockSpec((HIDDEN, 1), const_map),               # w4 (column)
                pl.BlockSpec((1, 1), const_map),                    # b4
            ],
            out_specs=pl.BlockSpec((1, tile_b), batch_out_map),
        ),
        compiler_params=pltpu.CompilerParams(
            dimension_semantics=("parallel",)),
    )(x, w1t, b1c, w2t, b2c, w3t, b3c, w4c, b4c)

    return out_t.reshape(B, 1)


def init_params(key, input_dim):
    """Deterministic init mimicking PyTorch Linear default (uniform +/- 1/sqrt(fan_in))."""
    dims = [(input_dim, HIDDEN), (HIDDEN, HIDDEN), (HIDDEN, HIDDEN), (HIDDEN, 1)]
    params = {}
    for i, (fan_in, fan_out) in enumerate(dims, start=1):
        key, kw, kb = jax.random.split(key, 3)
        bound = 1.0 / jnp.sqrt(jnp.asarray(fan_in, jnp.float32))
        params[f"w{i}"] = jax.random.uniform(
            kw, (fan_in, fan_out), jnp.float32, -bound, bound)
        params[f"b{i}"] = jax.random.uniform(
            kb, (1, fan_out), jnp.float32, -bound, bound)
    return params


def vnetwork_reference_f32(x, params):
    """Plain-JAX f32 reference (matches the PyTorch module exactly)."""
    h = jnp.tanh(x @ params["w1"] + params["b1"])
    h = jnp.maximum(h @ params["w2"] + params["b2"], 0.0)
    h = jnp.maximum(h @ params["w3"] + params["b3"], 0.0)
    return h @ params["w4"] + params["b4"]


def vnetwork_reference_bf16(x, params):
    """Reference mirroring the kernel's dtype handling (bf16 operands, f32 accum)."""
    bf, f32 = jnp.bfloat16, jnp.float32
    h = jnp.dot(x.astype(bf), params["w1"].astype(bf), preferred_element_type=f32)
    h = jnp.tanh(h + params["b1"])
    h = jnp.dot(h.astype(bf), params["w2"].astype(bf), preferred_element_type=f32)
    h = jnp.maximum(h + params["b2"], 0.0)
    h = jnp.dot(h.astype(bf), params["w3"].astype(bf), preferred_element_type=f32)
    h = jnp.maximum(h + params["b3"], 0.0)
    return (jnp.sum(h * params["w4"].reshape(1, HIDDEN), axis=-1, keepdims=True)
            + params["b4"])


if __name__ == "__main__":
    key = jax.random.PRNGKey(0)
    k_params, k_x1, k_x2, k_idx = jax.random.split(key, 4)

    # FrozenLake 4x4: 16 states, one-hot encoded -> input_dim = 16
    input_dim = 16
    params = init_params(k_params, input_dim)

    # Case 1: small batch, single (ragged) grid step.
    x1 = jax.random.normal(k_x1, (8, input_dim), jnp.float32)
    out1 = jax.block_until_ready(vnetwork_forward(x1, params))
    assert out1.shape == (8, 1), out1.shape
    assert jnp.allclose(out1, vnetwork_reference_bf16(x1, params),
                        atol=1e-3, rtol=1e-3)
    assert jnp.allclose(out1, vnetwork_reference_f32(x1, params),
                        atol=5e-2, rtol=5e-2)

    # Case 2: multi-step grid with a ragged last block (B=300, tile_b=128 -> grid=(3,)).
    x2 = jax.random.normal(k_x2, (300, input_dim), jnp.float32)
    out2 = jax.block_until_ready(vnetwork_forward(x2, params, tile_b=128))
    assert out2.shape == (300, 1), out2.shape
    assert jnp.allclose(out2, vnetwork_reference_bf16(x2, params),
                        atol=1e-3, rtol=1e-3)
    assert jnp.allclose(out2, vnetwork_reference_f32(x2, params),
                        atol=5e-2, rtol=5e-2)

    # Case 3: one-hot FrozenLake states (the real use case), default tile path.
    idx = jax.random.randint(k_idx, (64,), 0, input_dim)
    x3 = jax.nn.one_hot(idx, input_dim, dtype=jnp.float32)
    out3 = jax.block_until_ready(vnetwork_forward(x3, params))
    assert out3.shape == (64, 1), out3.shape
    assert jnp.allclose(out3, vnetwork_reference_bf16(x3, params),
                        atol=1e-3, rtol=1e-3)
    assert jnp.allclose(out3, vnetwork_reference_f32(x3, params),
                        atol=5e-2, rtol=5e-2)

    print("KERNEL_OK")
</pallas_src>

<mosaic_0001>
module attributes {stable_mosaic.version = 11 : i64} {
  func.func @vnet_kernel(%arg0: i32, %arg1: memref<128x16xf32, #tpu.memory_space<vmem>>, %arg2: memref<32x16xbf16, #tpu.memory_space<vmem>>, %arg3: memref<32x1xf32, #tpu.memory_space<vmem>>, %arg4: memref<32x32xbf16, #tpu.memory_space<vmem>>, %arg5: memref<32x1xf32, #tpu.memory_space<vmem>>, %arg6: memref<32x32xbf16, #tpu.memory_space<vmem>>, %arg7: memref<32x1xf32, #tpu.memory_space<vmem>>, %arg8: memref<32x1xf32, #tpu.memory_space<vmem>>, %arg9: memref<1x1xf32, #tpu.memory_space<vmem>>, %arg10: memref<1x128xf32, #tpu.memory_space<vmem>>) attributes {dimension_semantics = [#tpu.dimension_semantics<parallel>], iteration_bounds = array<i64: 1>, scalar_prefetch = 0 : i64, scratch_operands = 0 : i64, tpu.core_type = #tpu.core_type<tc>, window_params = [{transform_indices = @transform_0, window_bounds = array<i64: 128, 16>}, {pipeline_mode = #tpu.pipeline_mode<synchronous>, transform_indices = @transform_1, window_bounds = array<i64: 32, 16>}, {pipeline_mode = #tpu.pipeline_mode<synchronous>, transform_indices = @transform_2, window_bounds = array<i64: 32, 1>}, {pipeline_mode = #tpu.pipeline_mode<synchronous>, transform_indices = @transform_3, window_bounds = array<i64: 32, 32>}, {pipeline_mode = #tpu.pipeline_mode<synchronous>, transform_indices = @transform_4, window_bounds = array<i64: 32, 1>}, {pipeline_mode = #tpu.pipeline_mode<synchronous>, transform_indices = @transform_5, window_bounds = array<i64: 32, 32>}, {pipeline_mode = #tpu.pipeline_mode<synchronous>, transform_indices = @transform_6, window_bounds = array<i64: 32, 1>}, {pipeline_mode = #tpu.pipeline_mode<synchronous>, transform_indices = @transform_7, window_bounds = array<i64: 32, 1>}, {pipeline_mode = #tpu.pipeline_mode<synchronous>, transform_indices = @transform_8, window_bounds = array<i64: 1, 1>}, {transform_indices = @transform_9, window_bounds = array<i64: 1, 128>}]} {
    %c0 = arith.constant 0 : index
    %c0_0 = arith.constant 0 : index
    %0 = vector.load %arg1[%c0, %c0_0] : memref<128x16xf32, #tpu.memory_space<vmem>>, vector<128x16xf32>
    %1 = arith.truncf %0 : vector<128x16xf32> to vector<128x16xbf16>
    %c0_1 = arith.constant 0 : index
    %c0_2 = arith.constant 0 : index
    %2 = vector.load %arg2[%c0_1, %c0_2] : memref<32x16xbf16, #tpu.memory_space<vmem>>, vector<32x16xbf16>
    %cst = arith.constant dense<0.000000e+00> : vector<32x128xf32>
    %3 = tpu.matmul %2, %1, %cst {dimension_numbers = #tpu.dot_dimension_numbers<[1], [1], [0], [0], [0, 0, 1, 0], [], []>} : vector<32x16xbf16>, vector<128x16xbf16>, vector<32x128xf32> -> vector<32x128xf32>
    %c0_3 = arith.constant 0 : index
    %c0_4 = arith.constant 0 : index
    %4 = vector.load %arg3[%c0_3, %c0_4] : memref<32x1xf32, #tpu.memory_space<vmem>>, vector<32x1xf32>
    %5 = vector.broadcast %4 : vector<32x1xf32> to vector<32x128xf32>
    %6 = arith.addf %3, %5 : vector<32x128xf32>
    %7 = math.tanh %6 : vector<32x128xf32>
    %c0_5 = arith.constant 0 : index
    %c0_6 = arith.constant 0 : index
    %8 = vector.load %arg4[%c0_5, %c0_6] : memref<32x32xbf16, #tpu.memory_space<vmem>>, vector<32x32xbf16>
    %9 = arith.truncf %7 : vector<32x128xf32> to vector<32x128xbf16>
    %cst_7 = arith.constant dense<0.000000e+00> : vector<32x128xf32>
    %10 = tpu.matmul %8, %9, %cst_7 {dimension_numbers = #tpu.dot_dimension_numbers<[1], [0], [0], [1], [0, 0, 1, 1], [], []>} : vector<32x32xbf16>, vector<32x128xbf16>, vector<32x128xf32> -> vector<32x128xf32>
    %c0_8 = arith.constant 0 : index
    %c0_9 = arith.constant 0 : index
    %11 = vector.load %arg5[%c0_8, %c0_9] : memref<32x1xf32, #tpu.memory_space<vmem>>, vector<32x1xf32>
    %12 = vector.broadcast %11 : vector<32x1xf32> to vector<32x128xf32>
    %13 = arith.addf %10, %12 : vector<32x128xf32>
    %cst_10 = arith.constant 0.000000e+00 : f32
    %14 = vector.broadcast %cst_10 : f32 to vector<32x128xf32>
    %15 = arith.maximumf %13, %14 : vector<32x128xf32>
    %c0_11 = arith.constant 0 : index
    %c0_12 = arith.constant 0 : index
    %16 = vector.load %arg6[%c0_11, %c0_12] : memref<32x32xbf16, #tpu.memory_space<vmem>>, vector<32x32xbf16>
    %17 = arith.truncf %15 : vector<32x128xf32> to vector<32x128xbf16>
    %cst_13 = arith.constant dense<0.000000e+00> : vector<32x128xf32>
    %18 = tpu.matmul %16, %17, %cst_13 {dimension_numbers = #tpu.dot_dimension_numbers<[1], [0], [0], [1], [0, 0, 1, 1], [], []>} : vector<32x32xbf16>, vector<32x128xbf16>, vector<32x128xf32> -> vector<32x128xf32>
    %c0_14 = arith.constant 0 : index
    %c0_15 = arith.constant 0 : index
    %19 = vector.load %arg7[%c0_14, %c0_15] : memref<32x1xf32, #tpu.memory_space<vmem>>, vector<32x1xf32>
    %20 = vector.broadcast %19 : vector<32x1xf32> to vector<32x128xf32>
    %21 = arith.addf %18, %20 : vector<32x128xf32>
    %cst_16 = arith.constant 0.000000e+00 : f32
    %22 = vector.broadcast %cst_16 : f32 to vector<32x128xf32>
    %23 = arith.maximumf %21, %22 : vector<32x128xf32>
    %c0_17 = arith.constant 0 : index
    %c0_18 = arith.constant 0 : index
    %24 = vector.load %arg8[%c0_17, %c0_18] : memref<32x1xf32, #tpu.memory_space<vmem>>, vector<32x1xf32>
    %25 = vector.broadcast %24 : vector<32x1xf32> to vector<32x128xf32>
    %26 = arith.mulf %23, %25 : vector<32x128xf32>
    %cst_19 = arith.constant dense<0.000000e+00> : vector<128xf32>
    %27 = vector.multi_reduction <add>, %26, %cst_19 [0] : vector<32x128xf32> to vector<128xf32>
    %28 = vector.shape_cast %27 : vector<128xf32> to vector<1x128xf32>
    %c0_20 = arith.constant 0 : index
    %c0_21 = arith.constant 0 : index
    %29 = vector.load %arg9[%c0_20, %c0_21] : memref<1x1xf32, #tpu.memory_space<vmem>>, vector<1x1xf32>
    %30 = vector.broadcast %29 : vector<1x1xf32> to vector<1x128xf32>
    %31 = arith.addf %28, %30 : vector<1x128xf32>
    %c0_22 = arith.constant 0 : index
    %c0_23 = arith.constant 0 : index
    %32 = vector.load %arg10[%c0_22, %c0_23] : memref<1x128xf32, #tpu.memory_space<vmem>>, vector<1x128xf32>
    tpu.vector_store %arg10[%c0_22, %c0_23], %31 {strides = array<i32>} : memref<1x128xf32, #tpu.memory_space<vmem>>, vector<1x128xf32>,
    return
  }
  func.func @transform_0(%arg0: i32) -> (i32, i32) {
    %c0_i32 = arith.constant 0 : i32
    %c0_i32_0 = arith.constant 0 : i32
    return %arg0, %c0_i32 : i32, i32
  }
  func.func @transform_1(%arg0: i32) -> (i32, i32) {
    %c0_i32 = arith.constant 0 : i32
    %c0_i32_0 = arith.constant 0 : i32
    %c0_i32_1 = arith.constant 0 : i32
    return %c0_i32, %c0_i32_0 : i32, i32
  }
  func.func @transform_2(%arg0: i32) -> (i32, i32) {
    %c0_i32 = arith.constant 0 : i32
    %c0_i32_0 = arith.constant 0 : i32
    %c0_i32_1 = arith.constant 0 : i32
    return %c0_i32, %c0_i32_0 : i32, i32
  }
  func.func @transform_3(%arg0: i32) -> (i32, i32) {
    %c0_i32 = arith.constant 0 : i32
    %c0_i32_0 = arith.constant 0 : i32
    %c0_i32_1 = arith.constant 0 : i32
    return %c0_i32, %c0_i32_0 : i32, i32
  }
  func.func @transform_4(%arg0: i32) -> (i32, i32) {
    %c0_i32 = arith.constant 0 : i32
    %c0_i32_0 = arith.constant 0 : i32
    %c0_i32_1 = arith.constant 0 : i32
    return %c0_i32, %c0_i32_0 : i32, i32
  }
  func.func @transform_5(%arg0: i32) -> (i32, i32) {
    %c0_i32 = arith.constant 0 : i32
    %c0_i32_0 = arith.constant 0 : i32
    %c0_i32_1 = arith.constant 0 : i32
    return %c0_i32, %c0_i32_0 : i32, i32
  }
  func.func @transform_6(%arg0: i32) -> (i32, i32) {
    %c0_i32 = arith.constant 0 : i32
    %c0_i32_0 = arith.constant 0 : i32
    %c0_i32_1 = arith.constant 0 : i32
    return %c0_i32, %c0_i32_0 : i32, i32
  }
  func.func @transform_7(%arg0: i32) -> (i32, i32) {
    %c0_i32 = arith.constant 0 : i32
    %c0_i32_0 = arith.constant 0 : i32
    %c0_i32_1 = arith.constant 0 : i32
    return %c0_i32, %c0_i32_0 : i32, i32
  }
  func.func @transform_8(%arg0: i32) -> (i32, i32) {
    %c0_i32 = arith.constant 0 : i32
    %c0_i32_0 = arith.constant 0 : i32
    %c0_i32_1 = arith.constant 0 : i32
    return %c0_i32, %c0_i32_0 : i32, i32
  }
  func.func @transform_9(%arg0: i32) -> (i32, i32) {
    %c0_i32 = arith.constant 0 : i32
    %c0_i32_0 = arith.constant 0 : i32
    return %c0_i32, %arg0 : i32, i32
  }
}

</mosaic_0001>

<llo_original>
// kernel: tpu_custom_call.1
$region0: #{tpu_custom_call.1}
  #allocation0 [shape = 'u32[]', space=smem, size = 0x4, offset = 0x4, fixed_abs, tag = 'smem constant byte address 0x4 - core index']
  #allocation1 [shape = 'u32[144,128]{1,0:T(1,128)}', space=vmem, size = 0x12000, scoped, tag = 'internal scratch']
  #allocation2 [shape = 'f32[1,1]{1,0:T(1,128)S(1)}', space=vmem, size = 0x200, scoped, tag = 'scoped memory for tpu_custom_call.1']
  %s0 = inlined_call_operand.vmem [shape: f32[8,16], index: 0, kind: input, shape index: {}]
  %s1 = inlined_call_operand.vmem [shape: bf16[32,16], index: 1, kind: input, shape index: {}]
  %s2 = inlined_call_operand.vmem [shape: f32[32,1], index: 2, kind: input, shape index: {}]
  %s3 = inlined_call_operand.vmem [shape: bf16[32,32], index: 3, kind: input, shape index: {}]
  %s4 = inlined_call_operand.vmem [shape: f32[32,1], index: 4, kind: input, shape index: {}]
  %s5 = inlined_call_operand.vmem [shape: bf16[32,32], index: 5, kind: input, shape index: {}]
  %s6 = inlined_call_operand.vmem [shape: f32[32,1], index: 6, kind: input, shape index: {}]
  %s7 = inlined_call_operand.vmem [shape: f32[32,1], index: 7, kind: input, shape index: {}]
  %s8 = inlined_call_operand.<no memory space> [shape: f32[1,1], index: 8, kind: input, shape index: {}]
  %s9 = inlined_call_operand.hbm [shape: f32[1,8], index: 9, kind: output, shape index: {}]
  %s10 = sld [smem:[#allocation0]]
  $region46: #{tpu_custom_call.1} parent=0
    _
  %s12 = ssub.s32 1, %s10
  %s13 = scalar_select 0, %s12, %s10
  %v14 = vstv %s8
  %15 = vst [vmem:[#allocation2] sm:$0x1] %v14
  $region1: #{tpu_custom_call.1} parent=0
    #allocation3 [shape = 'u8[512]{0}', space=vmem, size = 0x400, scoped, tag = 'output window, operand 0, single buffered']
    #allocation4 [shape = 's32[1]{0}', space=sflag, size = 0x4, scoped, tag = 'scoped memory for tpu_custom_call.1']
    %16 = vsyncpa [#allocation4], 0
    // Predicated region
    $region2: #{tpu_custom_call.1} parent=1 // pred_check
      _
    $region3: #{tpu_custom_call.1} parent=1 // pred_check_branch
      %18 = sbr.rel (0) target = $region5
    $region4: #{tpu_custom_call.1} parent=1 // pred_region
      _
    $region5: #{tpu_custom_call.1} parent=1 // pred_fallthru
      _
    // Predicated region
    $region6: #{tpu_custom_call.1} parent=1 // pred_check
      _
    $region7: #{tpu_custom_call.1} parent=1 // pred_check_branch
      %20 = sbr.rel (0) target = $region9
    $region8: #{tpu_custom_call.1} parent=1 // pred_region
      _
    $region9: #{tpu_custom_call.1} parent=1 // pred_fallthru
      _
    // Predicated region
    $region10: #{tpu_custom_call.1} parent=1 // pred_check
      _
    $region11: #{tpu_custom_call.1} parent=1 // pred_check_branch
      %22 = sbr.rel (0) target = $region13
    $region12: #{tpu_custom_call.1} parent=1 // pred_region
      _
    $region13: #{tpu_custom_call.1} parent=1 // pred_fallthru
      _
    // Predicated region
    $region14: #{tpu_custom_call.1} parent=1 // pred_check
      _
    $region15: #{tpu_custom_call.1} parent=1 // pred_check_branch
      %24 = sbr.rel (0) target = $region17
    $region16: #{tpu_custom_call.1} parent=1 // pred_region
      _
    $region17: #{tpu_custom_call.1} parent=1 // pred_fallthru
      _
    // Predicated region
    $region18: #{tpu_custom_call.1} parent=1 // pred_check
      _
    $region19: #{tpu_custom_call.1} parent=1 // pred_check_branch
      %26 = sbr.rel (0) target = $region21
    $region20: #{tpu_custom_call.1} parent=1 // pred_region
      _
    $region21: #{tpu_custom_call.1} parent=1 // pred_fallthru
      _
    // Predicated region
    $region22: #{tpu_custom_call.1} parent=1 // pred_check
      _
    $region23: #{tpu_custom_call.1} parent=1 // pred_check_branch
      %28 = sbr.rel (0) target = $region25
    $region24: #{tpu_custom_call.1} parent=1 // pred_region
      _
    $region25: #{tpu_custom_call.1} parent=1 // pred_fallthru
      _
    // Predicated region
    $region26: #{tpu_custom_call.1} parent=1 // pred_check
      _
    $region27: #{tpu_custom_call.1} parent=1 // pred_check_branch
      %30 = sbr.rel (0) target = $region29
    $region28: #{tpu_custom_call.1} parent=1 // pred_region
      _
    $region29: #{tpu_custom_call.1} parent=1 // pred_fallthru
      _
    // Predicated region
    $region30: #{tpu_custom_call.1} parent=1 // pred_check
      _
    $region31: #{tpu_custom_call.1} parent=1 // pred_check_branch
      %32 = sbr.rel (0) target = $region33
    $region32: #{tpu_custom_call.1} parent=1 // pred_region
      _
    $region33: #{tpu_custom_call.1} parent=1 // pred_fallthru
      _
    // Predicated region
    $region34: #{tpu_custom_call.1} parent=1 // pred_check
      _
    $region35: #{tpu_custom_call.1} parent=1 // pred_check_branch
      %34 = sbr.rel (0) target = $region37
    $region36: #{tpu_custom_call.1} parent=1 // pred_region
      _
    $region37: #{tpu_custom_call.1} parent=1 // pred_fallthru
      _
    %v36 = vld [vmem:[%s0] sm:$0xff]
    %v37 = vld [vmem:[%s0 + $0x8] sm:$0xff]
    %v38 = vld [vmem:[%s0 + $0x10] sm:$0xff]
    %v39 = vld [vmem:[%s0 + $0x18] sm:$0xff]
    %v40 = vld [vmem:[%s0 + $0x20] sm:$0xff]
    %v41 = vld [vmem:[%s0 + $0x28] sm:$0xff]
    %v42 = vld [vmem:[%s0 + $0x30] sm:$0xff]
    %v43 = vld [vmem:[%s0 + $0x38] sm:$0xff]
    %v44 = vld [vmem:[%s0 + $0x40] sm:$0xff]
    %v45 = vld [vmem:[%s0 + $0x48] sm:$0xff]
    %v46 = vld [vmem:[%s0 + $0x50] sm:$0xff]
    %v47 = vld [vmem:[%s0 + $0x58] sm:$0xff]
    %v48 = vld [vmem:[%s0 + $0x60] sm:$0xff]
    %v49 = vld [vmem:[%s0 + $0x68] sm:$0xff]
    %v50 = vld [vmem:[%s0 + $0x70] sm:$0xff]
    %v51 = vld [vmem:[%s0 + $0x78] sm:$0xff]
    %v52 = vpack.c.bf16 %v37, %v36
    %v53 = vpack.c.bf16 %v39, %v38
    %v54 = vpack.c.bf16 %v41, %v40
    %v55 = vpack.c.bf16 %v43, %v42
    %v56 = vpack.c.bf16 %v45, %v44
    %v57 = vpack.c.bf16 %v47, %v46
    %v58 = vpack.c.bf16 %v49, %v48
    %v59 = vpack.c.bf16 %v51, %v50
    %v60 = vld [vmem:[%s1] sm:$0xf]
    %v61 = vld [vmem:[%s1 + $0x4] sm:$0xf]
    %v62 = vld [vmem:[%s1 + $0x8] sm:$0xf]
    %v63 = vld [vmem:[%s1 + $0xc] sm:$0xf]
    %v64 = vld [vmem:[%s2] sm:$0xff]
    %v65 = vld [vmem:[%s2 + $0x8] sm:$0xff]
    %v66 = vld [vmem:[%s2 + $0x10] sm:$0xff]
    %v67 = vld [vmem:[%s2 + $0x18] sm:$0xff]
    %69 = vset.pattern.permute.xlu0 0
    %70 = vperm.xlu0 %69, %v64
    %v71 = vpop.permute.xlu0 %70
    %74 = vset.pattern.permute.xlu0 0
    %75 = vperm.xlu0 %74, %v65
    %v76 = vpop.permute.xlu0 %75
    %79 = vset.pattern.permute.xlu0 0
    %80 = vperm.xlu0 %79, %v66
    %v81 = vpop.permute.xlu0 %80
    %84 = vset.pattern.permute.xlu0 0
    %85 = vperm.xlu0 %84, %v67
    %v86 = vpop.permute.xlu0 %85
    %v92 = vunpack.c.l.b16 %v60
    %v93 = vunpack.c.l.b16 %v61
    %v94 = vunpack.c.l.b16 %v62
    %v95 = vunpack.c.l.b16 %v63
    %v96 = vpack.c.b16 %v93, %v92
    %v97 = vpack.c.b16 %v95, %v94
    %vm98 = vcmask 130048
    %v100 = vsel %vm98, %v96, 0
    %v103 = vsel %vm98, %v97, 0
    %v106 = vsel %vm98, %v52, 0
    %v109 = vsel %vm98, %v53, 0
    %v112 = vsel %vm98, %v54, 0
    %v115 = vsel %vm98, %v55, 0
    %v118 = vsel %vm98, %v56, 0
    %v121 = vsel %vm98, %v57, 0
    %v124 = vsel %vm98, %v58, 0
    %v127 = vsel %vm98, %v59, 0
    %129 = vmatprep.subr.bf16.mxu0 0
    %130 = vmatpush1.bf16.xpose.msra.mxu0 %v127
    %131 = vmatprep.subr.bf16.mxu0 0
    %132 = vmatpush1.bf16.xpose.msra.mxu0 %v124
    %133 = vmatprep.subr.bf16.mxu0 0
    %134 = vmatpush1.bf16.xpose.msra.mxu0 %v121
    %135 = vmatprep.subr.bf16.mxu0 0
    %136 = vmatpush1.bf16.xpose.msra.mxu0 %v118
    %137 = vmatprep.subr.bf16.mxu0 0
    %138 = vmatpush1.bf16.xpose.msra.mxu0 %v115
    %139 = vmatprep.subr.bf16.mxu0 0
    %140 = vmatpush1.bf16.xpose.msra.mxu0 %v112
    %141 = vmatprep.subr.bf16.mxu0 0
    %142 = vmatpush1.bf16.xpose.msra.mxu0 %v109
    %143 = vmatprep.subr.bf16.mxu0 0
    %144 = vmatpush1.bf16.xpose.msra.mxu0 %v106
    %145 = vmatprep.subr.bf16.mxu0 0
    %146 = vmatpush2.bf16.xpose.msra.mxu0 0
    %147 = vmatprep.subr.bf16.mxu0 0
    %148 = vmatpush2.bf16.xpose.msra.mxu0 0
    %149 = vmatprep.subr.bf16.mxu0 0
    %150 = vmatpush2.bf16.xpose.msra.mxu0 0
    %151 = vmatprep.subr.bf16.mxu0 0
    %152 = vmatpush2.bf16.xpose.msra.mxu0 0
    %153 = vmatprep.subr.bf16.mxu0 0
    %154 = vmatpush2.bf16.xpose.msra.mxu0 0
    %155 = vmatprep.subr.bf16.mxu0 0
    %156 = vmatpush2.bf16.xpose.msra.mxu0 0
    %157 = vmatprep.subr.bf16.mxu0 0
    %158 = vmatpush2.bf16.xpose.msra.mxu0 0
    %159 = vmatprep.subr.bf16.mxu0 0
    %160 = vmatpush2.bf16.xpose.msra.mxu0 0
    %161 = vmatprep.mubr.bf16.mxu0 0
    %162 = vmatmul.mubr.bf16.gmra.mxu0 %v100
    %v163 = vpop.f32.mrf.mxu0
    %v164 = vadd.f32 %v71, %v163
    %v165 = vpop.f32.mrf.mxu0
    %v166 = vpop.f32.mrf.mxu0
    %v167 = vadd.f32 %v76, %v166
    %v168 = vpop.f32.mrf.mxu0
    %169 = vmatprep.mubr.bf16.mxu0 0
    %170 = vmatmul.mubr.bf16.gmra.mxu0 %v103
    %v171 = vpop.f32.mrf.mxu0
    %v172 = vadd.f32 %v81, %v171
    %v173 = vpop.f32.mrf.mxu0
    %v174 = vpop.f32.mrf.mxu0
    %v175 = vadd.f32 %v86, %v174
    %v176 = vpop.f32.mrf.mxu0
    %177 = vdwg.mxu0
    %v178 = vtanh.pop %v164
    %v179 = vtanh.pop %v167
    %v180 = vtanh.pop %v172
    %v181 = vtanh.pop %v175
    %v182 = vld [vmem:[%s3] sm:$0xf]
    %v183 = vld [vmem:[%s3 + $0x4] sm:$0xf]
    %v184 = vld [vmem:[%s3 + $0x8] sm:$0xf]
    %v185 = vld [vmem:[%s3 + $0xc] sm:$0xf]
    %v186 = vpack.c.bf16 %v179, %v178
    %v187 = vpack.c.bf16 %v181, %v180
    %v188 = vld [vmem:[%s4] sm:$0xff]
    %v189 = vld [vmem:[%s4 + $0x8] sm:$0xff]
    %v190 = vld [vmem:[%s4 + $0x10] sm:$0xff]
    %v191 = vld [vmem:[%s4 + $0x18] sm:$0xff]
    %193 = vset.pattern.permute.xlu0 0
    %194 = vperm.xlu0 %193, %v188
    %v195 = vpop.permute.xlu0 %194
    %198 = vset.pattern.permute.xlu0 0
    %199 = vperm.xlu0 %198, %v189
    %v200 = vpop.permute.xlu0 %199
    %203 = vset.pattern.permute.xlu0 0
    %204 = vperm.xlu0 %203, %v190
    %v205 = vpop.permute.xlu0 %204
    %208 = vset.pattern.permute.xlu0 0
    %209 = vperm.xlu0 %208, %v191
    %v210 = vpop.permute.xlu0 %209
    %v216 = vunpack.c.l.b16 %v182
    %v217 = vunpack.c.l.b16 %v183
    %v218 = vunpack.c.l.b16 %v184
    %v219 = vunpack.c.l.b16 %v185
    %v220 = vpack.c.b16 %v217, %v216
    %v221 = vpack.c.b16 %v219, %v218
    %vm222 = vcmask 261120
    %v224 = vsel %vm222, %v220, 0
    %v227 = vsel %vm222, %v221, 0
    %229 = vmatprep.subr.bf16.mxu0 0
    %230 = vmatpush1.bf16.msra.mxu0 0
    %231 = vmatprep.subr.bf16.mxu0 0
    %232 = vmatpush1.bf16.msra.mxu0 0
    %233 = vmatprep.subr.bf16.mxu0 0
    %234 = vmatpush1.bf16.msra.mxu0 0
    %235 = vmatprep.subr.bf16.mxu0 0
    %236 = vmatpush1.bf16.msra.mxu0 0
    %237 = vmatprep.subr.bf16.mxu0 0
    %238 = vmatpush1.bf16.msra.mxu0 0
    %239 = vmatprep.subr.bf16.mxu0 0
    %240 = vmatpush1.bf16.msra.mxu0 0
    %241 = vmatprep.subr.bf16.mxu0 0
    %242 = vmatpush1.bf16.msra.mxu0 %v187
    %243 = vmatprep.subr.bf16.mxu0 0
    %244 = vmatpush1.bf16.msra.mxu0 %v186
    %245 = vmatprep.subr.bf16.mxu0 0
    %246 = vmatpush2.bf16.msra.mxu0 0
    %247 = vmatprep.subr.bf16.mxu0 0
    %248 = vmatpush2.bf16.msra.mxu0 0
    %249 = vmatprep.subr.bf16.mxu0 0
    %250 = vmatpush2.bf16.msra.mxu0 0
    %251 = vmatprep.subr.bf16.mxu0 0
    %252 = vmatpush2.bf16.msra.mxu0 0
    %253 = vmatprep.subr.bf16.mxu0 0
    %254 = vmatpush2.bf16.msra.mxu0 0
    %255 = vmatprep.subr.bf16.mxu0 0
    %256 = vmatpush2.bf16.msra.mxu0 0
    %257 = vmatprep.subr.bf16.mxu0 0
    %258 = vmatpush2.bf16.msra.mxu0 0
    %259 = vmatprep.subr.bf16.mxu0 0
    %260 = vmatpush2.bf16.msra.mxu0 0
    %261 = vmatprep.mubr.bf16.mxu0 0
    %262 = vmatmul.mubr.bf16.gmra.mxu0 %v224
    %v263 = vpop.f32.mrf.mxu0
    %v264 = vadd.f32 %v195, %v263
    %v265 = vpop.f32.mrf.mxu0
    %v266 = vpop.f32.mrf.mxu0
    %v267 = vadd.f32 %v200, %v266
    %v268 = vpop.f32.mrf.mxu0
    %269 = vmatprep.mubr.bf16.mxu0 0
    %270 = vmatmul.mubr.bf16.gmra.mxu0 %v227
    %v271 = vpop.f32.mrf.mxu0
    %v272 = vadd.f32 %v205, %v271
    %v273 = vpop.f32.mrf.mxu0
    %v274 = vpop.f32.mrf.mxu0
    %v275 = vadd.f32 %v210, %v274
    %v276 = vpop.f32.mrf.mxu0
    %277 = vdwg.mxu0
    %v278 = vmax.f32 %v264, 0.0
    %v279 = vmax.f32 %v267, 0.0
    %v280 = vmax.f32 %v272, 0.0
    %v281 = vmax.f32 %v275, 0.0
    %v282 = vld [vmem:[%s5] sm:$0xf]
    %v283 = vld [vmem:[%s5 + $0x4] sm:$0xf]
    %v284 = vld [vmem:[%s5 + $0x8] sm:$0xf]
    %v285 = vld [vmem:[%s5 + $0xc] sm:$0xf]
    %v286 = vpack.c.bf16 %v279, %v278
    %v287 = vpack.c.bf16 %v281, %v280
    %v288 = vld [vmem:[%s6] sm:$0xff]
    %v289 = vld [vmem:[%s6 + $0x8] sm:$0xff]
    %v290 = vld [vmem:[%s6 + $0x10] sm:$0xff]
    %v291 = vld [vmem:[%s6 + $0x18] sm:$0xff]
    %293 = vset.pattern.permute.xlu0 0
    %294 = vperm.xlu0 %293, %v288
    %v295 = vpop.permute.xlu0 %294
    %298 = vset.pattern.permute.xlu0 0
    %299 = vperm.xlu0 %298, %v289
    %v300 = vpop.permute.xlu0 %299
    %303 = vset.pattern.permute.xlu0 0
    %304 = vperm.xlu0 %303, %v290
    %v305 = vpop.permute.xlu0 %304
    %308 = vset.pattern.permute.xlu0 0
    %309 = vperm.xlu0 %308, %v291
    %v310 = vpop.permute.xlu0 %309
    %v316 = vunpack.c.l.b16 %v282
    %v317 = vunpack.c.l.b16 %v283
    %v318 = vunpack.c.l.b16 %v284
    %v319 = vunpack.c.l.b16 %v285
    %v320 = vpack.c.b16 %v317, %v316
    %v321 = vpack.c.b16 %v319, %v318
    %v323 = vsel %vm222, %v320, 0
    %v326 = vsel %vm222, %v321, 0
    %328 = vmatprep.subr.bf16.mxu0 0
    %329 = vmatpush1.bf16.msra.mxu0 0
    %330 = vmatprep.subr.bf16.mxu0 0
    %331 = vmatpush1.bf16.msra.mxu0 0
    %332 = vmatprep.subr.bf16.mxu0 0
    %333 = vmatpush1.bf16.msra.mxu0 0
    %334 = vmatprep.subr.bf16.mxu0 0
    %335 = vmatpush1.bf16.msra.mxu0 0
    %336 = vmatprep.subr.bf16.mxu0 0
    %337 = vmatpush1.bf16.msra.mxu0 0
    %338 = vmatprep.subr.bf16.mxu0 0
    %339 = vmatpush1.bf16.msra.mxu0 0
    %340 = vmatprep.subr.bf16.mxu0 0
    %341 = vmatpush1.bf16.msra.mxu0 %v287
    %342 = vmatprep.subr.bf16.mxu0 0
    %343 = vmatpush1.bf16.msra.mxu0 %v286
    %344 = vmatprep.subr.bf16.mxu0 0
    %345 = vmatpush2.bf16.msra.mxu0 0
    %346 = vmatprep.subr.bf16.mxu0 0
    %347 = vmatpush2.bf16.msra.mxu0 0
    %348 = vmatprep.subr.bf16.mxu0 0
    %349 = vmatpush2.bf16.msra.mxu0 0
    %350 = vmatprep.subr.bf16.mxu0 0
    %351 = vmatpush2.bf16.msra.mxu0 0
    %352 = vmatprep.subr.bf16.mxu0 0
    %353 = vmatpush2.bf16.msra.mxu0 0
    %354 = vmatprep.subr.bf16.mxu0 0
    %355 = vmatpush2.bf16.msra.mxu0 0
    %356 = vmatprep.subr.bf16.mxu0 0
    %357 = vmatpush2.bf16.msra.mxu0 0
    %358 = vmatprep.subr.bf16.mxu0 0
    %359 = vmatpush2.bf16.msra.mxu0 0
    %360 = vmatprep.mubr.bf16.mxu0 0
    %361 = vmatmul.mubr.bf16.gmra.mxu0 %v323
    %v362 = vpop.f32.mrf.mxu0
    %v363 = vadd.f32 %v295, %v362
    %v364 = vpop.f32.mrf.mxu0
    %v365 = vpop.f32.mrf.mxu0
    %v366 = vadd.f32 %v300, %v365
    %v367 = vpop.f32.mrf.mxu0
    %368 = vmatprep.mubr.bf16.mxu0 0
    %369 = vmatmul.mubr.bf16.gmra.mxu0 %v326
    %v370 = vpop.f32.mrf.mxu0
    %v371 = vadd.f32 %v305, %v370
    %v372 = vpop.f32.mrf.mxu0
    %v373 = vpop.f32.mrf.mxu0
    %v374 = vadd.f32 %v310, %v373
    %v375 = vpop.f32.mrf.mxu0
    %376 = vdwg.mxu0
    %v377 = vmax.f32 %v363, 0.0
    %v378 = vmax.f32 %v366, 0.0
    %v379 = vmax.f32 %v371, 0.0
    %v380 = vmax.f32 %v374, 0.0
    %v381 = vld [vmem:[%s7] sm:$0xff]
    %v382 = vld [vmem:[%s7 + $0x8] sm:$0xff]
    %v383 = vld [vmem:[%s7 + $0x10] sm:$0xff]
    %v384 = vld [vmem:[%s7 + $0x18] sm:$0xff]
    %386 = vset.pattern.permute.xlu0 0
    %387 = vperm.xlu0 %386, %v381
    %v388 = vpop.permute.xlu0 %387
    %391 = vset.pattern.permute.xlu0 0
    %392 = vperm.xlu0 %391, %v382
    %v393 = vpop.permute.xlu0 %392
    %396 = vset.pattern.permute.xlu0 0
    %397 = vperm.xlu0 %396, %v383
    %v398 = vpop.permute.xlu0 %397
    %401 = vset.pattern.permute.xlu0 0
    %402 = vperm.xlu0 %401, %v384
    %v403 = vpop.permute.xlu0 %402
    %v405 = vmul.f32 %v377, %v388
    %v406 = vmul.f32 %v378, %v393
    %v407 = vmul.f32 %v379, %v398
    %v408 = vmul.f32 %v380, %v403
    %v409 = vadd.f32 %v405, %v406
    %v410 = vadd.f32 %v409, %v407
    %v411 = vadd.f32 %v410, %v408
    %v412 = vrot.slane %v411, 4
    %v413 = vadd.f32 %v411, %v412
    %v414 = vrot.slane %v413, 2
    %v415 = vadd.f32 %v413, %v414
    %v416 = vrot.slane %v415, 1
    %v417 = vadd.f32 %v415, %v416
    %v418 = vld [vmem:[#allocation2] sm:$0x1]
    %420 = vset.pattern.permute.xlu0 0
    %421 = vperm.xlu0 %420, %v418
    %v422 = vpop.permute.xlu0 %421
    %v424 = vlaneseq
    %v425 = vshrl.u32 %v424, 7
    %v426 = vsub.s32 0, %v425
    %v427 = vrot.slane %v422, %v426
    %v428 = vadd.f32 %v417, %v427
    %429 = vst [vmem:[#allocation3] sm:$0x1] %v428
    // Predicated region
    $region38: #{tpu_custom_call.1} parent=1 // pred_check
      _
    $region39: #{tpu_custom_call.1} parent=1 // pred_check_branch
      %431 = sbr.rel (0) target = $region41
    $region40: #{tpu_custom_call.1} parent=1 // pred_region
      %s433 = ssub.s32 16, 16
      %434 = vsyncadd [#allocation4], %s433
      %s436 = sshll.u32 [#allocation3], 4
      %s437 = int_to_ptr.vmem [resolvable:$true] %s436
      %439 = dma.vmem_to_hbm [thread:$0]  %s437, 16, %s9, [#allocation4]
    $region41: #{tpu_custom_call.1} parent=1 // pred_fallthru
      _
    // Predicated region
    $region42: #{tpu_custom_call.1} parent=1 // pred_check
      _
    $region43: #{tpu_custom_call.1} parent=1 // pred_check_branch
      %441 = sbr.rel (0) target = $region45
    $region44: #{tpu_custom_call.1} parent=1 // pred_region
      %442 = dma.done [#allocation4], 16
    $region45: #{tpu_custom_call.1} parent=1 // pred_fallthru
      _
    %443 = vsyncpa [#allocation4], 1

</llo_original>
